<compile_context>
chip_gen: v7x
topology: tpu7x:2x2x1
jax: 0.10.0
libtpu: 0.0.40
codegen_flags: <defaults>
</compile_context>

<pallas_src>
import functools

import jax
import jax.numpy as jnp
from jax.experimental import pallas as pl
from jax.experimental.pallas import tpu as pltpu

EPSILON = 1e-7
CLASSES = 3
LANES = 128
SUBLANE_UNIT = 16  # covers f32 (8,128) and bf16 (16,128) tiling


def _round_up(x: int, m: int) -> int:
    return ((x + m - 1) // m) * m


def _f1_partials_kernel(y_pred_ref, y_true_ref, tp_ref, sp_ref, cnt_ref,
                        *, valid_n, tile_rows, tiles_per_split):
    # y_pred_ref: (C, tile_rows, 128) logits (input dtype; upcast to f32 here)
    # y_true_ref: (tile_rows, 128) int32 labels (-1 in padded columns)
    # tp/sp/cnt_ref: (1, C, 128) f32 lane-dense accumulators (VMEM-resident per split)
    p_id = pl.program_id(0)            # parallel split (separate TensorCore on v7x)
    i = pl.program_id(1)               # row-tile within this split (reduction axis)

    @pl.when(i == 0)
    def _init():
        tp_ref[...] = jnp.zeros_like(tp_ref)
        sp_ref[...] = jnp.zeros_like(sp_ref)
        cnt_ref[...] = jnp.zeros_like(cnt_ref)

    yp = y_pred_ref[...].astype(jnp.float32)           # (C, tr, 128)
    labels = y_true_ref[...]                           # (tr, 128) int32
    c, tr, ln = yp.shape

    # Numerically stable softmax over the leading class axis: max/sum/broadcast are
    # elementwise across the C slabs (VPU), exp on EUP, one exact reciprocal per column.
    m = jnp.max(yp, axis=0, keepdims=True)             # (1, tr, 128)
    e = jnp.exp(yp - m)                                # (C, tr, 128)
    denom = jnp.sum(e, axis=0, keepdims=True)          # (1, tr, 128)
    p = e * pl.reciprocal(denom, approx=False)         # (C, tr, 128)

    # one-hot(labels) via class-index compare along the leading axis (padded labels = -1).
    class_ids = jax.lax.broadcasted_iota(jnp.int32, (c, tr, ln), 0)
    oh = (class_ids == labels[None]).astype(jnp.float32)

    tile_cols = tile_rows * LANES
    block = p_id * tiles_per_split + i                 # unclamped global row-tile index
    block_start = block * tile_cols

    def _accumulate(p_v, oh_v):
        # fp = sum_p - tp ; fn = count - tp  (computed in the wrapper epilogue)
        tp_ref[...] += jnp.sum(oh_v * p_v, axis=1)[None]   # (1, C, 128)
        sp_ref[...] += jnp.sum(p_v, axis=1)[None]
        cnt_ref[...] += jnp.sum(oh_v, axis=1)[None]

    @pl.when(block_start + tile_cols <= valid_n)
    def _interior():                                   # fully-valid tile: no mask work
        _accumulate(p, oh)

    @pl.when(block_start + tile_cols > valid_n)
    def _ragged():                                     # final ragged / clamped-dup tile
        col = block_start + (
            jax.lax.broadcasted_iota(jnp.int32, (tr, ln), 0) * LANES
            + jax.lax.broadcasted_iota(jnp.int32, (tr, ln), 1))
        valid = (col < valid_n).astype(jnp.float32)[None]   # (1, tr, 128)
        _accumulate(p * valid, oh * valid)


def _f1_loss_jax(y_pred, y_true, classes, epsilon=EPSILON):
    """Pure-JAX mirror of the PyTorch module (also the small-batch fallback)."""
    oh = jax.nn.one_hot(y_true, classes, dtype=jnp.float32)
    p = jax.nn.softmax(y_pred.astype(jnp.float32), axis=1)
    tp = jnp.sum(oh * p, axis=0)
    fp = jnp.sum((1.0 - oh) * p, axis=0)
    fn = jnp.sum(oh * (1.0 - p), axis=0)
    precision = tp / (tp + fp + epsilon)
    recall = tp / (tp + fn + epsilon)
    f1 = 2.0 * precision * recall / (precision + recall + epsilon)
    f1 = jnp.clip(f1, epsilon, 1.0 - epsilon)
    return 1.0 - jnp.mean(f1)


def f1_loss(y_pred: jax.Array, y_true: jax.Array, *, epsilon: float = EPSILON,
            tile_rows: int = 512, num_parallel: int = 2,
            min_rows_for_pallas: int = 32768) -> jax.Array:
    """y_pred: (N, C) float32/bf16 logits; y_true: (N,) int labels. Returns scalar f32."""
    assert y_pred.ndim == 2
    assert y_true.ndim == 1
    n, c = y_pred.shape
    assert y_true.shape[0] == n

    if n < max(min_rows_for_pallas, 1):
        # Launch + the wrapper transpose cost several us; fused XLA wins at small/medium N.
        return _f1_loss_jax(y_pred, y_true, classes=c, epsilon=epsilon)

    r = pl.cdiv(n, LANES)                                        # lane-rows of the batch
    tr = _round_up(min(tile_rows, _round_up(r, SUBLANE_UNIT)), SUBLANE_UNIT)
    r_pad = _round_up(r, tr)
    n_pad = r_pad * LANES
    num_blocks = r_pad // tr
    p_splits = max(1, min(num_parallel, num_blocks))             # 2 -> use both v7x TCs
    tiles_per_split = pl.cdiv(num_blocks, p_splits)
    last_block = num_blocks - 1

    # One materializing pass: the (N, C) -> (C, N) transpose (needed to put the batch on
    # the 128-lane axis) fuses with the small pad to tile granularity; the reshape to
    # (C, r_pad, 128) is free.
    yp = y_pred.T
    lab = y_true.astype(jnp.int32)
    if n_pad != n:
        yp = jnp.pad(yp, ((0, 0), (0, n_pad - n)))               # finite zeros
        lab = jnp.pad(lab, (0, n_pad - n), constant_values=-1)   # never matches a class
    yp3 = yp.reshape(c, r_pad, LANES)
    lab3 = lab.reshape(r_pad, LANES)

    kernel = functools.partial(
        _f1_partials_kernel, valid_n=n, tile_rows=tr, tiles_per_split=tiles_per_split)

    tp_p, sp_p, cnt_p = pl.pallas_call(
        kernel,
        out_shape=(
            jax.ShapeDtypeStruct((p_splits, c, LANES), jnp.float32),
            jax.ShapeDtypeStruct((p_splits, c, LANES), jnp.float32),
            jax.ShapeDtypeStruct((p_splits, c, LANES), jnp.float32),
        ),
        grid_spec=pltpu.PrefetchScalarGridSpec(
            num_scalar_prefetch=0,
            grid=(p_splits, tiles_per_split),
            in_specs=[
                pl.BlockSpec(
                    (c, tr, LANES),
                    lambda p, i: (0, jnp.minimum(p * tiles_per_split + i, last_block), 0)),
                pl.BlockSpec(
                    (tr, LANES),
                    lambda p, i: (jnp.minimum(p * tiles_per_split + i, last_block), 0)),
            ],
            out_specs=[
                pl.BlockSpec((1, c, LANES), lambda p, i: (p, 0, 0)),
                pl.BlockSpec((1, c, LANES), lambda p, i: (p, 0, 0)),
                pl.BlockSpec((1, c, LANES), lambda p, i: (p, 0, 0)),
            ],
        ),
        compiler_params=pltpu.CompilerParams(
            dimension_semantics=("parallel", "arbitrary")),
    )(yp3, lab3)

    # Tiny epilogue in the wrapper: collapse lanes + parallel splits, then F1.
    tp = jnp.sum(tp_p, axis=(0, 2))                              # (C,)
    sum_p = jnp.sum(sp_p, axis=(0, 2))
    cnt = jnp.sum(cnt_p, axis=(0, 2))
    precision = tp / (sum_p + epsilon)                           # sum_p = tp + fp
    recall = tp / (cnt + epsilon)                                # cnt   = tp + fn
    f1 = 2.0 * precision * recall / (precision + recall + epsilon)
    f1 = jnp.clip(f1, epsilon, 1.0 - epsilon)
    return 1.0 - jnp.mean(f1)


if __name__ == "__main__":
    key = jax.random.PRNGKey(0)
    k1, k2, k3, k4 = jax.random.split(key, 4)
    C = CLASSES

    # Case 1: single row-block, exercises ragged-column masking (300 of 2048 padded cols).
    N1 = 300
    yp1 = jax.random.normal(k1, (N1, C), dtype=jnp.float32)
    yt1 = jax.random.randint(k2, (N1,), 0, C, dtype=jnp.int32)
    out1 = jax.block_until_ready(f1_loss(yp1, yt1, min_rows_for_pallas=0))
    ref1 = _f1_loss_jax(yp1, yt1, classes=C)
    assert jnp.allclose(out1, ref1, atol=1e-5, rtol=1e-5), (out1, ref1)

    # Case 2: multi-tile + 2-way parallel split (grid (2, 2)), ragged last tile and one
    # clamped/fully-masked duplicate tile.
    N2 = 5000
    yp2 = jax.random.normal(k3, (N2, C), dtype=jnp.float32)
    yt2 = jax.random.randint(k4, (N2,), 0, C, dtype=jnp.int32)
    out2 = jax.block_until_ready(f1_loss(yp2, yt2, tile_rows=16, min_rows_for_pallas=0))
    ref2 = _f1_loss_jax(yp2, yt2, classes=C)
    assert jnp.allclose(out2, ref2, atol=1e-5, rtol=1e-5), (out2, ref2)

    # Case 3: tiny batch dispatches to the pure-JAX fallback.
    out3 = jax.block_until_ready(f1_loss(yp1[:8], yt1[:8]))
    ref3 = _f1_loss_jax(yp1[:8], yt1[:8], classes=C)
    assert jnp.allclose(out3, ref3, atol=1e-5, rtol=1e-5), (out3, ref3)

    print("KERNEL_OK")
</pallas_src>

<mosaic_0001>
module attributes {stable_mosaic.version = 11 : i64} {
  func.func @_f1_partials_kernel(%arg0: i32, %arg1: i32, %arg2: memref<3x16x128xf32, #tpu.memory_space<vmem>>, %arg3: memref<16x128xi32, #tpu.memory_space<vmem>>, %arg4: memref<1x3x128xf32, #tpu.memory_space<vmem>>, %arg5: memref<1x3x128xf32, #tpu.memory_space<vmem>>, %arg6: memref<1x3x128xf32, #tpu.memory_space<vmem>>) attributes {dimension_semantics = [#tpu.dimension_semantics<parallel>, #tpu.dimension_semantics<arbitrary>], iteration_bounds = array<i64: 1, 1>, scalar_prefetch = 0 : i64, scratch_operands = 0 : i64, tpu.core_type = #tpu.core_type<tc>, window_params = [{transform_indices = @transform_0, window_bounds = array<i64: 3, 16, 128>}, {transform_indices = @transform_1, window_bounds = array<i64: 16, 128>}, {transform_indices = @transform_2, window_bounds = array<i64: 1, 3, 128>}, {transform_indices = @transform_3, window_bounds = array<i64: 1, 3, 128>}, {transform_indices = @transform_4, window_bounds = array<i64: 1, 3, 128>}]} {
    %c0_i32 = arith.constant 0 : i32
    %0 = arith.cmpi eq, %arg1, %c0_i32 : i32
    %1 = arith.extui %0 : i1 to i32
    %c0_i32_0 = arith.constant 0 : i32
    %2 = arith.cmpi ne, %1, %c0_i32_0 : i32
    scf.if %2 {
      %cst_11 = arith.constant 0.000000e+00 : f32
      %32 = vector.broadcast %cst_11 : f32 to vector<1x3x128xf32>
      %c0_12 = arith.constant 0 : index
      %c0_13 = arith.constant 0 : index
      %c0_14 = arith.constant 0 : index
      %33 = vector.load %arg4[%c0_12, %c0_13, %c0_14] : memref<1x3x128xf32, #tpu.memory_space<vmem>>, vector<1x3x128xf32>
      tpu.vector_store %arg4[%c0_12, %c0_13, %c0_14], %32 {strides = array<i32>} : memref<1x3x128xf32, #tpu.memory_space<vmem>>, vector<1x3x128xf32>,
      %cst_15 = arith.constant 0.000000e+00 : f32
      %34 = vector.broadcast %cst_15 : f32 to vector<1x3x128xf32>
      %c0_16 = arith.constant 0 : index
      %c0_17 = arith.constant 0 : index
      %c0_18 = arith.constant 0 : index
      %35 = vector.load %arg5[%c0_16, %c0_17, %c0_18] : memref<1x3x128xf32, #tpu.memory_space<vmem>>, vector<1x3x128xf32>
      tpu.vector_store %arg5[%c0_16, %c0_17, %c0_18], %34 {strides = array<i32>} : memref<1x3x128xf32, #tpu.memory_space<vmem>>, vector<1x3x128xf32>,
      %cst_19 = arith.constant 0.000000e+00 : f32
      %36 = vector.broadcast %cst_19 : f32 to vector<1x3x128xf32>
      %c0_20 = arith.constant 0 : index
      %c0_21 = arith.constant 0 : index
      %c0_22 = arith.constant 0 : index
      %37 = vector.load %arg6[%c0_20, %c0_21, %c0_22] : memref<1x3x128xf32, #tpu.memory_space<vmem>>, vector<1x3x128xf32>
      tpu.vector_store %arg6[%c0_20, %c0_21, %c0_22], %36 {strides = array<i32>} : memref<1x3x128xf32, #tpu.memory_space<vmem>>, vector<1x3x128xf32>,
    } else {
    }
    %c0 = arith.constant 0 : index
    %c0_1 = arith.constant 0 : index
    %c0_2 = arith.constant 0 : index
    %3 = vector.load %arg2[%c0, %c0_1, %c0_2] : memref<3x16x128xf32, #tpu.memory_space<vmem>>, vector<3x16x128xf32>
    %c0_3 = arith.constant 0 : index
    %c0_4 = arith.constant 0 : index
    %4 = vector.load %arg3[%c0_3, %c0_4] : memref<16x128xi32, #tpu.memory_space<vmem>>, vector<16x128xi32>
    %cst = arith.constant dense<0xFF800000> : vector<16x128xf32>
    %5 = vector.multi_reduction <maximumf>, %3, %cst [0] : vector<3x16x128xf32> to vector<16x128xf32>
    %6 = vector.shape_cast %5 : vector<16x128xf32> to vector<1x16x128xf32>
    %7 = vector.broadcast %6 : vector<1x16x128xf32> to vector<3x16x128xf32>
    %8 = arith.subf %3, %7 : vector<3x16x128xf32>
    %9 = math.exp %8 : vector<3x16x128xf32>
    %cst_5 = arith.constant dense<0.000000e+00> : vector<16x128xf32>
    %10 = vector.multi_reduction <add>, %9, %cst_5 [0] : vector<3x16x128xf32> to vector<16x128xf32>
    %11 = vector.shape_cast %10 : vector<16x128xf32> to vector<1x16x128xf32>
    %12 = tpu.reciprocal %11 : vector<1x16x128xf32> -> vector<1x16x128xf32>
    %13 = vector.broadcast %12 : vector<1x16x128xf32> to vector<3x16x128xf32>
    %14 = arith.mulf %9, %13 : vector<3x16x128xf32>
    %15 = tpu.iota {dimensions = array<i32: 0>} : vector<3x16x128xi32>
    %16 = vector.shape_cast %4 : vector<16x128xi32> to vector<1x16x128xi32>
    %17 = vector.broadcast %16 : vector<1x16x128xi32> to vector<3x16x128xi32>
    %18 = arith.cmpi eq, %15, %17 : vector<3x16x128xi32>
    %19 = arith.extui %18 : vector<3x16x128xi1> to vector<3x16x128xi32>
    %20 = arith.sitofp %19 : vector<3x16x128xi32> to vector<3x16x128xf32>
    %c1_i32 = arith.constant 1 : i32
    %21 = arith.muli %arg0, %c1_i32 : i32
    %22 = arith.addi %21, %arg1 : i32
    %c2048_i32 = arith.constant 2048 : i32
    %23 = arith.muli %22, %c2048_i32 : i32
    %c2048_i32_6 = arith.constant 2048 : i32
    %24 = arith.addi %23, %c2048_i32_6 : i32
    %c300_i32 = arith.constant 300 : i32
    %25 = arith.cmpi sle, %24, %c300_i32 : i32
    %26 = arith.extui %25 : i1 to i32
    %c0_i32_7 = arith.constant 0 : i32
    %27 = arith.cmpi ne, %26, %c0_i32_7 : i32
    scf.if %27 {
      %c0_11 = arith.constant 0 : index
      %c0_12 = arith.constant 0 : index
      %c0_13 = arith.constant 0 : index
      %32 = vector.load %arg4[%c0_11, %c0_12, %c0_13] : memref<1x3x128xf32, #tpu.memory_space<vmem>>, vector<1x3x128xf32>
      %33 = arith.mulf %20, %14 : vector<3x16x128xf32>
      %cst_14 = arith.constant dense<0.000000e+00> : vector<3x128xf32>
      %34 = vector.multi_reduction <add>, %33, %cst_14 [1] : vector<3x16x128xf32> to vector<3x128xf32>
      %35 = vector.shape_cast %34 : vector<3x128xf32> to vector<1x3x128xf32>
      %36 = arith.addf %32, %35 : vector<1x3x128xf32>
      %c0_15 = arith.constant 0 : index
      %c0_16 = arith.constant 0 : index
      %c0_17 = arith.constant 0 : index
      %37 = vector.load %arg4[%c0_15, %c0_16, %c0_17] : memref<1x3x128xf32, #tpu.memory_space<vmem>>, vector<1x3x128xf32>
      tpu.vector_store %arg4[%c0_15, %c0_16, %c0_17], %36 {strides = array<i32>} : memref<1x3x128xf32, #tpu.memory_space<vmem>>, vector<1x3x128xf32>,
      %c0_18 = arith.constant 0 : index
      %c0_19 = arith.constant 0 : index
      %c0_20 = arith.constant 0 : index
      %38 = vector.load %arg5[%c0_18, %c0_19, %c0_20] : memref<1x3x128xf32, #tpu.memory_space<vmem>>, vector<1x3x128xf32>
      %cst_21 = arith.constant dense<0.000000e+00> : vector<3x128xf32>
      %39 = vector.multi_reduction <add>, %14, %cst_21 [1] : vector<3x16x128xf32> to vector<3x128xf32>
      %40 = vector.shape_cast %39 : vector<3x128xf32> to vector<1x3x128xf32>
      %41 = arith.addf %38, %40 : vector<1x3x128xf32>
      %c0_22 = arith.constant 0 : index
      %c0_23 = arith.constant 0 : index
      %c0_24 = arith.constant 0 : index
      %42 = vector.load %arg5[%c0_22, %c0_23, %c0_24] : memref<1x3x128xf32, #tpu.memory_space<vmem>>, vector<1x3x128xf32>
      tpu.vector_store %arg5[%c0_22, %c0_23, %c0_24], %41 {strides = array<i32>} : memref<1x3x128xf32, #tpu.memory_space<vmem>>, vector<1x3x128xf32>,
      %c0_25 = arith.constant 0 : index
      %c0_26 = arith.constant 0 : index
      %c0_27 = arith.constant 0 : index
      %43 = vector.load %arg6[%c0_25, %c0_26, %c0_27] : memref<1x3x128xf32, #tpu.memory_space<vmem>>, vector<1x3x128xf32>
      %cst_28 = arith.constant dense<0.000000e+00> : vector<3x128xf32>
      %44 = vector.multi_reduction <add>, %20, %cst_28 [1] : vector<3x16x128xf32> to vector<3x128xf32>
      %45 = vector.shape_cast %44 : vector<3x128xf32> to vector<1x3x128xf32>
      %46 = arith.addf %43, %45 : vector<1x3x128xf32>
      %c0_29 = arith.constant 0 : index
      %c0_30 = arith.constant 0 : index
      %c0_31 = arith.constant 0 : index
      %47 = vector.load %arg6[%c0_29, %c0_30, %c0_31] : memref<1x3x128xf32, #tpu.memory_space<vmem>>, vector<1x3x128xf32>
      tpu.vector_store %arg6[%c0_29, %c0_30, %c0_31], %46 {strides = array<i32>} : memref<1x3x128xf32, #tpu.memory_space<vmem>>, vector<1x3x128xf32>,
    } else {
    }
    %c2048_i32_8 = arith.constant 2048 : i32
    %28 = arith.addi %23, %c2048_i32_8 : i32
    %c300_i32_9 = arith.constant 300 : i32
    %29 = arith.cmpi sgt, %28, %c300_i32_9 : i32
    %30 = arith.extui %29 : i1 to i32
    %c0_i32_10 = arith.constant 0 : i32
    %31 = arith.cmpi ne, %30, %c0_i32_10 : i32
    scf.if %31 {
      %32 = tpu.iota {dimensions = array<i32: 0>} : vector<16x128xi32>
      %c128_i32 = arith.constant 128 : i32
      %33 = vector.broadcast %c128_i32 : i32 to vector<16x128xi32>
      %34 = arith.muli %32, %33 : vector<16x128xi32>
      %35 = tpu.iota {dimensions = array<i32: 1>} : vector<16x128xi32>
      %36 = arith.addi %34, %35 : vector<16x128xi32>
      %37 = vector.broadcast %23 : i32 to vector<16x128xi32>
      %38 = arith.addi %37, %36 : vector<16x128xi32>
      %c300_i32_11 = arith.constant 300 : i32
      %39 = vector.broadcast %c300_i32_11 : i32 to vector<16x128xi32>
      %40 = arith.cmpi slt, %38, %39 : vector<16x128xi32>
      %41 = arith.extui %40 : vector<16x128xi1> to vector<16x128xi32>
      %42 = arith.sitofp %41 : vector<16x128xi32> to vector<16x128xf32>
      %43 = vector.shape_cast %42 : vector<16x128xf32> to vector<1x16x128xf32>
      %44 = vector.broadcast %43 : vector<1x16x128xf32> to vector<3x16x128xf32>
      %45 = arith.mulf %14, %44 : vector<3x16x128xf32>
      %46 = vector.broadcast %43 : vector<1x16x128xf32> to vector<3x16x128xf32>
      %47 = arith.mulf %20, %46 : vector<3x16x128xf32>
      %c0_12 = arith.constant 0 : index
      %c0_13 = arith.constant 0 : index
      %c0_14 = arith.constant 0 : index
      %48 = vector.load %arg4[%c0_12, %c0_13, %c0_14] : memref<1x3x128xf32, #tpu.memory_space<vmem>>, vector<1x3x128xf32>
      %49 = arith.mulf %47, %45 : vector<3x16x128xf32>
      %cst_15 = arith.constant dense<0.000000e+00> : vector<3x128xf32>
      %50 = vector.multi_reduction <add>, %49, %cst_15 [1] : vector<3x16x128xf32> to vector<3x128xf32>
      %51 = vector.shape_cast %50 : vector<3x128xf32> to vector<1x3x128xf32>
      %52 = arith.addf %48, %51 : vector<1x3x128xf32>
      %c0_16 = arith.constant 0 : index
      %c0_17 = arith.constant 0 : index
      %c0_18 = arith.constant 0 : index
      %53 = vector.load %arg4[%c0_16, %c0_17, %c0_18] : memref<1x3x128xf32, #tpu.memory_space<vmem>>, vector<1x3x128xf32>
      tpu.vector_store %arg4[%c0_16, %c0_17, %c0_18], %52 {strides = array<i32>} : memref<1x3x128xf32, #tpu.memory_space<vmem>>, vector<1x3x128xf32>,
      %c0_19 = arith.constant 0 : index
      %c0_20 = arith.constant 0 : index
      %c0_21 = arith.constant 0 : index
      %54 = vector.load %arg5[%c0_19, %c0_20, %c0_21] : memref<1x3x128xf32, #tpu.memory_space<vmem>>, vector<1x3x128xf32>
      %cst_22 = arith.constant dense<0.000000e+00> : vector<3x128xf32>
      %55 = vector.multi_reduction <add>, %45, %cst_22 [1] : vector<3x16x128xf32> to vector<3x128xf32>
      %56 = vector.shape_cast %55 : vector<3x128xf32> to vector<1x3x128xf32>
      %57 = arith.addf %54, %56 : vector<1x3x128xf32>
      %c0_23 = arith.constant 0 : index
      %c0_24 = arith.constant 0 : index
      %c0_25 = arith.constant 0 : index
      %58 = vector.load %arg5[%c0_23, %c0_24, %c0_25] : memref<1x3x128xf32, #tpu.memory_space<vmem>>, vector<1x3x128xf32>
      tpu.vector_store %arg5[%c0_23, %c0_24, %c0_25], %57 {strides = array<i32>} : memref<1x3x128xf32, #tpu.memory_space<vmem>>, vector<1x3x128xf32>,
      %c0_26 = arith.constant 0 : index
      %c0_27 = arith.constant 0 : index
      %c0_28 = arith.constant 0 : index
      %59 = vector.load %arg6[%c0_26, %c0_27, %c0_28] : memref<1x3x128xf32, #tpu.memory_space<vmem>>, vector<1x3x128xf32>
      %cst_29 = arith.constant dense<0.000000e+00> : vector<3x128xf32>
      %60 = vector.multi_reduction <add>, %47, %cst_29 [1] : vector<3x16x128xf32> to vector<3x128xf32>
      %61 = vector.shape_cast %60 : vector<3x128xf32> to vector<1x3x128xf32>
      %62 = arith.addf %59, %61 : vector<1x3x128xf32>
      %c0_30 = arith.constant 0 : index
      %c0_31 = arith.constant 0 : index
      %c0_32 = arith.constant 0 : index
      %63 = vector.load %arg6[%c0_30, %c0_31, %c0_32] : memref<1x3x128xf32, #tpu.memory_space<vmem>>, vector<1x3x128xf32>
      tpu.vector_store %arg6[%c0_30, %c0_31, %c0_32], %62 {strides = array<i32>} : memref<1x3x128xf32, #tpu.memory_space<vmem>>, vector<1x3x128xf32>,
    } else {
    }
    return
  }
  func.func @transform_0(%arg0: i32, %arg1: i32) -> (i32, i32, i32) {
    %c1_i32 = arith.constant 1 : i32
    %0 = arith.muli %arg0, %c1_i32 : i32
    %1 = arith.addi %0, %arg1 : i32
    %c0_i32 = arith.constant 0 : i32
    %2 = arith.minsi %1, %c0_i32 : i32
    %c0_i32_0 = arith.constant 0 : i32
    %c0_i32_1 = arith.constant 0 : i32
    %c0_i32_2 = arith.constant 0 : i32
    return %c0_i32_0, %2, %c0_i32_1 : i32, i32, i32
  }
  func.func @transform_1(%arg0: i32, %arg1: i32) -> (i32, i32) {
    %c1_i32 = arith.constant 1 : i32
    %0 = arith.muli %arg0, %c1_i32 : i32
    %1 = arith.addi %0, %arg1 : i32
    %c0_i32 = arith.constant 0 : i32
    %2 = arith.minsi %1, %c0_i32 : i32
    %c0_i32_0 = arith.constant 0 : i32
    %c0_i32_1 = arith.constant 0 : i32
    return %2, %c0_i32_0 : i32, i32
  }
  func.func @transform_2(%arg0: i32, %arg1: i32) -> (i32, i32, i32) {
    %c0_i32 = arith.constant 0 : i32
    %c0_i32_0 = arith.constant 0 : i32
    %c0_i32_1 = arith.constant 0 : i32
    return %arg0, %c0_i32, %c0_i32_0 : i32, i32, i32
  }
  func.func @transform_3(%arg0: i32, %arg1: i32) -> (i32, i32, i32) {
    %c0_i32 = arith.constant 0 : i32
    %c0_i32_0 = arith.constant 0 : i32
    %c0_i32_1 = arith.constant 0 : i32
    return %arg0, %c0_i32, %c0_i32_0 : i32, i32, i32
  }
  func.func @transform_4(%arg0: i32, %arg1: i32) -> (i32, i32, i32) {
    %c0_i32 = arith.constant 0 : i32
    %c0_i32_0 = arith.constant 0 : i32
    %c0_i32_1 = arith.constant 0 : i32
    return %arg0, %c0_i32, %c0_i32_0 : i32, i32, i32
  }
}

</mosaic_0001>

<llo_original>
// kernel: tpu_custom_call.1
$region0: #{tpu_custom_call.1}
  #allocation0 [shape = 'u32[]', space=smem, size = 0x4, offset = 0x4, fixed_abs, tag = 'smem constant byte address 0x4 - core index']
  #allocation1 [shape = 'u32[144,128]{1,0:T(1,128)}', space=vmem, size = 0x12000, scoped, tag = 'internal scratch']
  %s0 = inlined_call_operand.hbm [shape: f32[3,16,128], index: 0, kind: input, shape index: {}]
  %s1 = inlined_call_operand.hbm [shape: s32[16,128], index: 1, kind: input, shape index: {}]
  %s2 = inlined_call_operand.vmem [shape: f32[1,3,128], index: 2, kind: output, shape index: {0}]
  %s3 = inlined_call_operand.vmem [shape: f32[1,3,128], index: 3, kind: output, shape index: {1}]
  %s4 = inlined_call_operand.vmem [shape: f32[1,3,128], index: 4, kind: output, shape index: {2}]
  %5 = xla_tuple %s2, %s3, %s4
  %s6 = sld [smem:[#allocation0]]
  $region54: #{tpu_custom_call.1} parent=0
    _
  %s8 = ssub.s32 1, %s6
  %s9 = scalar_select 0, %s8, %s6
  $region1: #{tpu_custom_call.1} parent=0
    #allocation2 [shape = 'u8[24576]{0}', space=vmem, size = 0x6000, scoped, tag = 'input window, operand 0, single buffered']
    #allocation3 [shape = 's32[1]{0}', space=sflag, size = 0x4, scoped, tag = 'scoped memory for tpu_custom_call.1']
    #allocation4 [shape = 'u8[8192]{0}', space=vmem, size = 0x2000, scoped, tag = 'input window, operand 1, single buffered']
    #allocation5 [shape = 's32[1]{0}', space=sflag, size = 0x4, scoped, tag = 'scoped memory for tpu_custom_call.1']
    %10 = vsyncpa [#allocation3], 0
    %11 = vsyncpa [#allocation5], 0
    // Predicated region
    $region2: #{tpu_custom_call.1} parent=1 // pred_check
      _
    $region3: #{tpu_custom_call.1} parent=1 // pred_check_branch
      %13 = sbr.rel (0) target = $region5
    $region4: #{tpu_custom_call.1} parent=1 // pred_region
      %s14 = sadd.s32 0, 0
      %p15 = scmp.lt.s32.totalorder %s14, 0
      %s16 = scalar_select %p15, %s14, 0
      %s17 = smul.u32 2, %s16
      %s19 = ssub.s32 768, 768
      %20 = vsyncadd [#allocation3], %s19
      %s21 = smul.addr %s17, 128
      %s22 = scalar_lea.hbm %s0, %s21
      %s23 = sshll.u32 [#allocation2], 4
      %s24 = int_to_ptr.vmem [resolvable:$true] %s23
      %29 = dma.hbm_to_vmem [thread:$0]  %s22, 768, %s24, [#allocation3], 128, 128, 8
    $region5: #{tpu_custom_call.1} parent=1 // pred_fallthru
      _
    // Predicated region
    $region6: #{tpu_custom_call.1} parent=1 // pred_check
      _
    $region7: #{tpu_custom_call.1} parent=1 // pred_check_branch
      %31 = sbr.rel (0) target = $region9
    $region8: #{tpu_custom_call.1} parent=1 // pred_region
      %s32 = sadd.s32 0, 0
      %p33 = scmp.lt.s32.totalorder %s32, 0
      %s34 = scalar_select %p33, %s32, 0
      %s35 = smul.u32 2, %s34
      %s37 = ssub.s32 256, 256
      %38 = vsyncadd [#allocation5], %s37
      %s39 = smul.addr %s35, 128
      %s40 = scalar_lea.hbm %s1, %s39
      %s41 = sshll.u32 [#allocation4], 4
      %s42 = int_to_ptr.vmem [resolvable:$true] %s41
      %47 = dma.hbm_to_vmem [thread:$0]  %s40, 256, %s42, [#allocation5], 128, 128, 8
    $region9: #{tpu_custom_call.1} parent=1 // pred_fallthru
      _
    // Predicated region
    $region10: #{tpu_custom_call.1} parent=1 // pred_check
      _
    $region11: #{tpu_custom_call.1} parent=1 // pred_check_branch
      %49 = sbr.rel (0) target = $region13
    $region12: #{tpu_custom_call.1} parent=1 // pred_region
      %50 = dma.done [#allocation3], 768
    $region13: #{tpu_custom_call.1} parent=1 // pred_fallthru
      _
    // Predicated region
    $region14: #{tpu_custom_call.1} parent=1 // pred_check
      _
    $region15: #{tpu_custom_call.1} parent=1 // pred_check_branch
      %52 = sbr.rel (0) target = $region17
    $region16: #{tpu_custom_call.1} parent=1 // pred_region
      %53 = dma.done [#allocation5], 256
    $region17: #{tpu_custom_call.1} parent=1 // pred_fallthru
      _
    %s54 = sadd.s32 0, 0
    %p55 = scmp.lt.s32.totalorder %s54, 0
    %s56 = scalar_select %p55, %s54, 0
    %s57 = smul.u32 2, %s56
    %s58 = sadd.s32 0, 0
    %p59 = scmp.lt.s32.totalorder %s58, 0
    %s60 = scalar_select %p59, %s58, 0
    %s61 = smul.u32 2, %s60
    %p62 = scmp.eq.s32.totalorder 0, 0
    // Predicated region
    $region18: #{tpu_custom_call.1} parent=1 // pred_check
      %p63 = pneg %p62
    $region19: #{tpu_custom_call.1} parent=1 // pred_check_branch
      %65 = sbr.rel (%p63) target = $region21
    $region20: #{tpu_custom_call.1} parent=1 // pred_region
      %66 = vst [vmem:[%s2] sm:$0x7] 0.0
      %67 = vst [vmem:[%s3] sm:$0x7] 0.0
      %68 = vst [vmem:[%s4] sm:$0x7] 0.0
    $region21: #{tpu_custom_call.1} parent=1 // pred_fallthru
      _
    %v69 = vld [vmem:[#allocation2] sm:$0xff]
    %v70 = vld [vmem:[#allocation2 + $0x8] sm:$0xff]
    %v71 = vld [vmem:[#allocation2 + $0x10] sm:$0xff]
    %v72 = vld [vmem:[#allocation2 + $0x18] sm:$0xff]
    %v73 = vld [vmem:[#allocation2 + $0x20] sm:$0xff]
    %v74 = vld [vmem:[#allocation2 + $0x28] sm:$0xff]
    %v75 = vld [vmem:[#allocation4] sm:$0xff]
    %v76 = vld [vmem:[#allocation4 + $0x8] sm:$0xff]
    %v77 = vmax.f32 %v69, %v73
    %v78 = vmax.f32 %v77, %v71
    %v79 = vmax.f32 %v70, %v74
    %v80 = vmax.f32 %v79, %v72
    %v81 = vsub.f32 %v69, %v78
    %v82 = vsub.f32 %v70, %v80
    %v83 = vsub.f32 %v71, %v78
    %v84 = vsub.f32 %v72, %v80
    %v85 = vsub.f32 %v73, %v78
    %v86 = vsub.f32 %v74, %v80
    %v87 = vmul.f32 %v81, 1.442695
    %v88 = vpow.pop %v87
    %v89 = vmul.f32 %v82, 1.442695
    %v90 = vpow.pop %v89
    %v91 = vmul.f32 %v83, 1.442695
    %v92 = vpow.pop %v91
    %v93 = vmul.f32 %v84, 1.442695
    %v94 = vpow.pop %v93
    %v95 = vmul.f32 %v85, 1.442695
    %v96 = vpow.pop %v95
    %v97 = vmul.f32 %v86, 1.442695
    %v98 = vpow.pop %v97
    %v99 = vadd.f32 %v88, %v92
    %v100 = vadd.f32 %v99, %v96
    %v101 = vadd.f32 %v90, %v94
    %v102 = vadd.f32 %v101, %v98
    %v103 = vrcp.pop %v100
    %v104 = vrcp.pop %v102
    %v105 = vmul.f32 %v88, %v103
    %v106 = vmul.f32 %v90, %v104
    %v107 = vmul.f32 %v92, %v103
    %v108 = vmul.f32 %v94, %v104
    %v109 = vmul.f32 %v96, %v103
    %v110 = vmul.f32 %v98, %v104
    %vm111 = vcmp.eq.s32.totalorder %v75, 0
    %vm112 = vcmp.eq.s32.totalorder %v76, 0
    %vm113 = vcmp.eq.s32.totalorder %v75, 1
    %vm114 = vcmp.eq.s32.totalorder %v76, 1
    %vm115 = vcmp.eq.s32.totalorder %v75, 2
    %vm116 = vcmp.eq.s32.totalorder %v76, 2
    %v117 = vsel %vm111, 1, 0
    %v118 = vsel %vm112, 1, 0
    %v119 = vsel %vm113, 1, 0
    %v120 = vsel %vm114, 1, 0
    %v121 = vsel %vm115, 1, 0
    %v122 = vsel %vm116, 1, 0
    %v123 = vcvt.s32.f32 %v117
    %v124 = vcvt.s32.f32 %v118
    %v125 = vcvt.s32.f32 %v119
    %v126 = vcvt.s32.f32 %v120
    %v127 = vcvt.s32.f32 %v121
    %v128 = vcvt.s32.f32 %v122
    %s129 = sadd.s32 0, 0
    %s130 = smul.u32 %s129, 2048
    %s131 = sadd.s32 %s130, 2048
    %p132 = scmp.le.s32.totalorder %s131, 300
    // Predicated region
    $region22: #{tpu_custom_call.1} parent=1 // pred_check
      %p133 = pneg %p132
    $region23: #{tpu_custom_call.1} parent=1 // pred_check_branch
      %135 = sbr.rel (%p133) target = $region25
    $region24: #{tpu_custom_call.1} parent=1 // pred_region
      %v136 = vld [vmem:[%s2] sm:$0x7]
      %v137 = vmul.f32 %v123, %v105
      %v138 = vmul.f32 %v124, %v106
      %v139 = vmul.f32 %v125, %v107
      %v140 = vmul.f32 %v126, %v108
      %v141 = vmul.f32 %v127, %v109
      %v142 = vmul.f32 %v128, %v110
      %v143 = vadd.f32 %v137, %v138
      %v144 = vrot.slane %v143, 4
      %v145 = vadd.f32 %v143, %v144
      %v146 = vrot.slane %v145, 2
      %v147 = vadd.f32 %v145, %v146
      %v148 = vrot.slane %v147, 1
      %v149 = vadd.f32 %v147, %v148
      %v150 = vadd.f32 %v139, %v140
      %v151 = vrot.slane %v150, 4
      %v152 = vadd.f32 %v150, %v151
      %v153 = vrot.slane %v152, 2
      %v154 = vadd.f32 %v152, %v153
      %v155 = vrot.slane %v154, 1
      %v156 = vadd.f32 %v154, %v155
      %v157 = vadd.f32 %v141, %v142
      %v158 = vrot.slane %v157, 4
      %v159 = vadd.f32 %v157, %v158
      %v160 = vrot.slane %v159, 2
      %v161 = vadd.f32 %v159, %v160
      %v162 = vrot.slane %v161, 1
      %v163 = vadd.f32 %v161, %v162
      %vm167 = vcmask 1041409
      %v168 = vsel %vm167, %v156, %v149
      %vm169 = vcmask 1042434
      %v170 = vsel %vm169, %v163, %v168
      %v172 = vadd.f32 %v136, %v170
      %173 = vst [vmem:[%s2] sm:$0x7] %v172
      %v174 = vld [vmem:[%s3] sm:$0x7]
      %v175 = vadd.f32 %v105, %v106
      %v176 = vrot.slane %v175, 4
      %v177 = vadd.f32 %v175, %v176
      %v178 = vrot.slane %v177, 2
      %v179 = vadd.f32 %v177, %v178
      %v180 = vrot.slane %v179, 1
      %v181 = vadd.f32 %v179, %v180
      %v182 = vadd.f32 %v107, %v108
      %v183 = vrot.slane %v182, 4
      %v184 = vadd.f32 %v182, %v183
      %v185 = vrot.slane %v184, 2
      %v186 = vadd.f32 %v184, %v185
      %v187 = vrot.slane %v186, 1
      %v188 = vadd.f32 %v186, %v187
      %v189 = vadd.f32 %v109, %v110
      %v190 = vrot.slane %v189, 4
      %v191 = vadd.f32 %v189, %v190
      %v192 = vrot.slane %v191, 2
      %v193 = vadd.f32 %v191, %v192
      %v194 = vrot.slane %v193, 1
      %v195 = vadd.f32 %v193, %v194
      %v199 = vsel %vm167, %v188, %v181
      %v200 = vsel %vm169, %v195, %v199
      %v202 = vadd.f32 %v174, %v200
      %203 = vst [vmem:[%s3] sm:$0x7] %v202
      %v204 = vld [vmem:[%s4] sm:$0x7]
      %v205 = vadd.f32 %v123, %v124
      %v206 = vrot.slane %v205, 4
      %v207 = vadd.f32 %v205, %v206
      %v208 = vrot.slane %v207, 2
      %v209 = vadd.f32 %v207, %v208
      %v210 = vrot.slane %v209, 1
      %v211 = vadd.f32 %v209, %v210
      %v212 = vadd.f32 %v125, %v126
      %v213 = vrot.slane %v212, 4
      %v214 = vadd.f32 %v212, %v213
      %v215 = vrot.slane %v214, 2
      %v216 = vadd.f32 %v214, %v215
      %v217 = vrot.slane %v216, 1
      %v218 = vadd.f32 %v216, %v217
      %v219 = vadd.f32 %v127, %v128
      %v220 = vrot.slane %v219, 4
      %v221 = vadd.f32 %v219, %v220
      %v222 = vrot.slane %v221, 2
      %v223 = vadd.f32 %v221, %v222
      %v224 = vrot.slane %v223, 1
      %v225 = vadd.f32 %v223, %v224
      %v229 = vsel %vm167, %v218, %v211
      %v230 = vsel %vm169, %v225, %v229
      %v232 = vadd.f32 %v204, %v230
      %233 = vst [vmem:[%s4] sm:$0x7] %v232
    $region25: #{tpu_custom_call.1} parent=1 // pred_fallthru
      _
    %p234 = scmp.gt.s32.totalorder %s131, 300
    // Predicated region
    $region26: #{tpu_custom_call.1} parent=1 // pred_check
      %p235 = pneg %p234
    $region27: #{tpu_custom_call.1} parent=1 // pred_check_branch
      %237 = sbr.rel (%p235) target = $region29
    $region28: #{tpu_custom_call.1} parent=1 // pred_region
      %v238 = vlaneseq
      %v239 = vshrl.u32 %v238, 7
      %v240 = vadd.s32 %v239, 8
      %v241 = vmul.u32 %v239, 128
      %v242 = vmul.u32 %v240, 128
      %v243 = vlaneseq
      %v244 = vand.u32 %v243, 127
      %v245 = vadd.s32 %v241, %v244
      %v246 = vadd.s32 %v242, %v244
      %v247 = vstv %s130
      %v248 = vadd.s32 %v247, %v245
      %v249 = vadd.s32 %v247, %v246
      %vm250 = vcmp.lt.s32.totalorder %v248, 300
      %vm251 = vcmp.lt.s32.totalorder %v249, 300
      %v252 = vsel %vm250, 1, 0
      %v253 = vsel %vm251, 1, 0
      %v254 = vcvt.s32.f32 %v252
      %v255 = vcvt.s32.f32 %v253
      %v256 = vmul.f32 %v105, %v254
      %v257 = vmul.f32 %v106, %v255
      %v258 = vmul.f32 %v107, %v254
      %v259 = vmul.f32 %v108, %v255
      %v260 = vmul.f32 %v109, %v254
      %v261 = vmul.f32 %v110, %v255
      %v262 = vmul.f32 %v123, %v254
      %v263 = vmul.f32 %v124, %v255
      %v264 = vmul.f32 %v125, %v254
      %v265 = vmul.f32 %v126, %v255
      %v266 = vmul.f32 %v127, %v254
      %v267 = vmul.f32 %v128, %v255
      %v268 = vld [vmem:[%s2] sm:$0x7]
      %v269 = vmul.f32 %v262, %v256
      %v270 = vmul.f32 %v263, %v257
      %v271 = vmul.f32 %v264, %v258
      %v272 = vmul.f32 %v265, %v259
      %v273 = vmul.f32 %v266, %v260
      %v274 = vmul.f32 %v267, %v261
      %v275 = vadd.f32 %v269, %v270
      %v276 = vrot.slane %v275, 4
      %v277 = vadd.f32 %v275, %v276
      %v278 = vrot.slane %v277, 2
      %v279 = vadd.f32 %v277, %v278
      %v280 = vrot.slane %v279, 1
      %v281 = vadd.f32 %v279, %v280
      %v282 = vadd.f32 %v271, %v272
      %v283 = vrot.slane %v282, 4
      %v284 = vadd.f32 %v282, %v283
      %v285 = vrot.slane %v284, 2
      %v286 = vadd.f32 %v284, %v285
      %v287 = vrot.slane %v286, 1
      %v288 = vadd.f32 %v286, %v287
      %v289 = vadd.f32 %v273, %v274
      %v290 = vrot.slane %v289, 4
      %v291 = vadd.f32 %v289, %v290
      %v292 = vrot.slane %v291, 2
      %v293 = vadd.f32 %v291, %v292
      %v294 = vrot.slane %v293, 1
      %v295 = vadd.f32 %v293, %v294
      %vm299 = vcmask 1041409
      %v300 = vsel %vm299, %v288, %v281
      %vm301 = vcmask 1042434
      %v302 = vsel %vm301, %v295, %v300
      %v304 = vadd.f32 %v268, %v302
      %305 = vst [vmem:[%s2] sm:$0x7] %v304
      %v306 = vld [vmem:[%s3] sm:$0x7]
      %v307 = vadd.f32 %v256, %v257
      %v308 = vrot.slane %v307, 4
      %v309 = vadd.f32 %v307, %v308
      %v310 = vrot.slane %v309, 2
      %v311 = vadd.f32 %v309, %v310
      %v312 = vrot.slane %v311, 1
      %v313 = vadd.f32 %v311, %v312
      %v314 = vadd.f32 %v258, %v259
      %v315 = vrot.slane %v314, 4
      %v316 = vadd.f32 %v314, %v315
      %v317 = vrot.slane %v316, 2
      %v318 = vadd.f32 %v316, %v317
      %v319 = vrot.slane %v318, 1
      %v320 = vadd.f32 %v318, %v319
      %v321 = vadd.f32 %v260, %v261
      %v322 = vrot.slane %v321, 4
      %v323 = vadd.f32 %v321, %v322
      %v324 = vrot.slane %v323, 2
      %v325 = vadd.f32 %v323, %v324
      %v326 = vrot.slane %v325, 1
      %v327 = vadd.f32 %v325, %v326
      %v331 = vsel %vm299, %v320, %v313
      %v332 = vsel %vm301, %v327, %v331
      %v334 = vadd.f32 %v306, %v332
      %335 = vst [vmem:[%s3] sm:$0x7] %v334
      %v336 = vld [vmem:[%s4] sm:$0x7]
      %v337 = vadd.f32 %v262, %v263
      %v338 = vrot.slane %v337, 4
      %v339 = vadd.f32 %v337, %v338
      %v340 = vrot.slane %v339, 2
      %v341 = vadd.f32 %v339, %v340
      %v342 = vrot.slane %v341, 1
      %v343 = vadd.f32 %v341, %v342
      %v344 = vadd.f32 %v264, %v265
      %v345 = vrot.slane %v344, 4
      %v346 = vadd.f32 %v344, %v345
      %v347 = vrot.slane %v346, 2
      %v348 = vadd.f32 %v346, %v347
      %v349 = vrot.slane %v348, 1
      %v350 = vadd.f32 %v348, %v349
      %v351 = vadd.f32 %v266, %v267
      %v352 = vrot.slane %v351, 4
      %v353 = vadd.f32 %v351, %v352
      %v354 = vrot.slane %v353, 2
      %v355 = vadd.f32 %v353, %v354
      %v356 = vrot.slane %v355, 1
      %v357 = vadd.f32 %v355, %v356
      %v361 = vsel %vm299, %v350, %v343
      %v362 = vsel %vm301, %v357, %v361
      %v364 = vadd.f32 %v336, %v362
      %365 = vst [vmem:[%s4] sm:$0x7] %v364
    $region29: #{tpu_custom_call.1} parent=1 // pred_fallthru
      _
    // Predicated region
    $region30: #{tpu_custom_call.1} parent=1 // pred_check
      _
    $region31: #{tpu_custom_call.1} parent=1 // pred_check_branch
      %367 = sbr.rel (0) target = $region33
    $region32: #{tpu_custom_call.1} parent=1 // pred_region
      _
    $region33: #{tpu_custom_call.1} parent=1 // pred_fallthru
      _
    // Predicated region
    $region34: #{tpu_custom_call.1} parent=1 // pred_check
      _
    $region35: #{tpu_custom_call.1} parent=1 // pred_check_branch
      %369 = sbr.rel (0) target = $region37
    $region36: #{tpu_custom_call.1} parent=1 // pred_region
      _
    $region37: #{tpu_custom_call.1} parent=1 // pred_fallthru
      _
    // Predicated region
    $region38: #{tpu_custom_call.1} parent=1 // pred_check
      _
    $region39: #{tpu_custom_call.1} parent=1 // pred_check_branch
      %371 = sbr.rel (0) target = $region41
    $region40: #{tpu_custom_call.1} parent=1 // pred_region
      _
    $region41: #{tpu_custom_call.1} parent=1 // pred_fallthru
      _
    // Predicated region
    $region42: #{tpu_custom_call.1} parent=1 // pred_check
      _
    $region43: #{tpu_custom_call.1} parent=1 // pred_check_branch
      %373 = sbr.rel (0) target = $region45
    $region44: #{tpu_custom_call.1} parent=1 // pred_region
      _
    $region45: #{tpu_custom_call.1} parent=1 // pred_fallthru
      _
    // Predicated region
    $region46: #{tpu_custom_call.1} parent=1 // pred_check
      _
    $region47: #{tpu_custom_call.1} parent=1 // pred_check_branch
      %375 = sbr.rel (0) target = $region49
    $region48: #{tpu_custom_call.1} parent=1 // pred_region
      _
    $region49: #{tpu_custom_call.1} parent=1 // pred_fallthru
      _
    // Predicated region
    $region50: #{tpu_custom_call.1} parent=1 // pred_check
      _
    $region51: #{tpu_custom_call.1} parent=1 // pred_check_branch
      %377 = sbr.rel (0) target = $region53
    $region52: #{tpu_custom_call.1} parent=1 // pred_region
      _
    $region53: #{tpu_custom_call.1} parent=1 // pred_fallthru
      _
    %378 = vsyncpa [#allocation3], 1
    %379 = vsyncpa [#allocation5], 1

</llo_original>
